<compile_context>
chip_gen: v7x
topology: tpu7x:2x2x1
jax: 0.10.0
libtpu: 0.0.40
codegen_flags: <defaults>
</compile_context>

<pallas_src>
import jax
import jax.numpy as jnp
import numpy as np
from jax.experimental import pallas as pl
from jax.experimental.pallas import tpu as pltpu

INPUT_SIZE = 784
HIDDEN = 50
NUM_CLASSES = 10

HID_PAD = 128   # 50 zero-padded to one full lane vreg
OUT_PAD = 128   # 10 zero-padded to one full lane vreg


def _round_up(n, m):
    return (n + m - 1) // m * m


def mlp_kernel(x_ref, w1_ref, b1_ref, w2_ref, b2_ref, o_ref):
    # x arrives as the raw f32 tile; bf16 cast happens here (VPU work hidden
    # under the x DMA) so the wrapper never materializes a second copy of x.
    x_bf16 = x_ref[...].astype(jnp.bfloat16)
    # fc1: bf16 inputs on the MXU, f32 accumulation; bias + ReLU in f32 on VPU.
    h = jnp.dot(x_bf16, w1_ref[...], preferred_element_type=jnp.float32)
    h = jnp.maximum(h + b1_ref[...], 0.0)          # b1 is (1, 128), broadcasts
    # fc2: padded rows of W2 / entries of b2 are exactly zero, so padded hidden
    # lanes cannot leak into the real logits.
    logits = jnp.dot(h.astype(jnp.bfloat16), w2_ref[...],
                     preferred_element_type=jnp.float32)
    o_ref[...] = (logits + b2_ref[...]).astype(o_ref.dtype)   # bf16 store


def prepare_params(w1, b1, w2, b2):
    """One-time pad+cast of the weights into the kernel's lane-dense layouts.

    w1: [784, 50]; b1: [1, 50] or [50]; w2: [50, 10]; b2: [1, 10] or [10]
    (weights stored transposed vs. PyTorch, i.e. (in, out) for x @ W).
    Call once and reuse the result for every nn_forward call.
    """
    b1 = jnp.reshape(b1, (1, -1)).astype(jnp.float32)
    b2 = jnp.reshape(b2, (1, -1)).astype(jnp.float32)
    w1_p = jnp.zeros((INPUT_SIZE, HID_PAD), jnp.bfloat16)
    w1_p = w1_p.at[:, :HIDDEN].set(w1.astype(jnp.bfloat16))
    b1_p = jnp.zeros((1, HID_PAD), jnp.float32).at[:, :HIDDEN].set(b1)
    w2_p = jnp.zeros((HID_PAD, OUT_PAD), jnp.bfloat16)
    w2_p = w2_p.at[:HIDDEN, :NUM_CLASSES].set(w2.astype(jnp.bfloat16))
    b2_p = jnp.zeros((1, OUT_PAD), jnp.float32).at[:, :NUM_CLASSES].set(b2)
    return w1_p, b1_p, w2_p, b2_p


def nn_forward(x, w1_p, b1_p, w2_p, b2_p, *, batch_tile=1024):
    """Pallas forward pass.

    x: [B, 784] f32 (streamed unpadded); padded params from prepare_params().
    Returns logits [B, 10] f32.
    """
    B = x.shape[0]

    # Batch tile: multiple of 16 sublanes (bf16 output packing), no larger than
    # needed, and for big batches split into >= 2 grid steps so the "parallel"
    # axis can shard across v7x's two TensorCores.
    tb = min(batch_tile, max(16, _round_up(B, 16)))
    if B > 256:
        tb = min(tb, max(16, _round_up(-(-B // 2), 16)))
    grid = pl.cdiv(B, tb)

    out = pl.pallas_call(
        mlp_kernel,
        out_shape=jax.ShapeDtypeStruct((B, OUT_PAD), jnp.bfloat16),
        grid_spec=pl.GridSpec(
            grid=(grid,),
            in_specs=[
                pl.BlockSpec((tb, INPUT_SIZE), lambda i: (i, 0)),        # x: streamed per step
                pl.BlockSpec((INPUT_SIZE, HID_PAD), lambda i: (0, 0)),   # W1: VMEM-resident
                pl.BlockSpec((1, HID_PAD), lambda i: (0, 0)),            # b1: VMEM-resident
                pl.BlockSpec((HID_PAD, OUT_PAD), lambda i: (0, 0)),      # W2: VMEM-resident
                pl.BlockSpec((1, OUT_PAD), lambda i: (0, 0)),            # b2: VMEM-resident
            ],
            out_specs=pl.BlockSpec((tb, OUT_PAD), lambda i: (i, 0)),
        ),
        compiler_params=pltpu.CompilerParams(
            # Independent batch tiles -> shardable across v7x's 2 TensorCores
            # (harmless no-op on single-TC v5e/v6e).
            dimension_semantics=("parallel",),
            # Large batch tiles (incl. user-chosen > 1024) also fit on v5e,
            # whose default scoped VMEM is only 16 MiB.
            vmem_limit_bytes=32 * 1024 * 1024,
        ),
    )(x, w1_p, b1_p, w2_p, b2_p)

    return out[:, :NUM_CLASSES].astype(jnp.float32)


def init_params(key):
    """Deterministic init mimicking nn.Linear's U(-1/sqrt(fan_in), 1/sqrt(fan_in))."""
    k1, k2, k3, k4 = jax.random.split(key, 4)
    bound1 = 1.0 / np.sqrt(INPUT_SIZE)
    bound2 = 1.0 / np.sqrt(HIDDEN)
    # Stored transposed relative to PyTorch (out,in) -> (in,out) for x @ W.
    w1 = jax.random.uniform(k1, (INPUT_SIZE, HIDDEN), jnp.float32, -bound1, bound1)
    b1 = jax.random.uniform(k2, (1, HIDDEN), jnp.float32, -bound1, bound1)
    w2 = jax.random.uniform(k3, (HIDDEN, NUM_CLASSES), jnp.float32, -bound2, bound2)
    b2 = jax.random.uniform(k4, (1, NUM_CLASSES), jnp.float32, -bound2, bound2)
    return w1, b1, w2, b2


def _bf16_reference(x, w1, b1, w2, b2):
    """Pure-JAX reference doing the same bf16-input / f32-acc / bf16-out math."""
    h = jnp.maximum(
        jnp.dot(x.astype(jnp.bfloat16), w1.astype(jnp.bfloat16),
                preferred_element_type=jnp.float32) + b1, 0.0)
    out = jnp.dot(h.astype(jnp.bfloat16), w2.astype(jnp.bfloat16),
                  preferred_element_type=jnp.float32) + b2
    return out.astype(jnp.bfloat16).astype(jnp.float32)


if __name__ == "__main__":
    key = jax.random.PRNGKey(0)
    kx, kp = jax.random.split(key)
    B = 64  # small batch
    x = jax.random.normal(kx, (B, INPUT_SIZE), jnp.float32)
    w1, b1, w2, b2 = init_params(kp)
    params = prepare_params(w1, b1, w2, b2)   # one-time weight padding/cast

    logits = jax.block_until_ready(nn_forward(x, *params))
    assert logits.shape == (B, NUM_CLASSES)

    # (1) Tight check vs a reference doing the same bf16/f32-acc/bf16-out math.
    ref_bf = _bf16_reference(x, w1, b1, w2, b2)
    np.testing.assert_allclose(np.asarray(logits), np.asarray(ref_bf),
                               rtol=1e-2, atol=1e-2)

    # (2) Loose check vs the full-f32 semantics of the original PyTorch module
    #     (difference is only bf16 quantization of matmul inputs and logits).
    ref_f32 = jnp.maximum(x @ w1 + b1, 0.0) @ w2 + b2
    np.testing.assert_allclose(np.asarray(logits), np.asarray(ref_f32),
                               rtol=5e-2, atol=5e-2)

    # (3) Exercise the multi-step batch-tiled grid with a ragged final block
    #     (B=300, tile=128 -> grid=(3,), last block row-masked on store).
    B2 = 300
    x2 = jax.random.normal(jax.random.PRNGKey(1), (B2, INPUT_SIZE), jnp.float32)
    logits2 = jax.block_until_ready(nn_forward(x2, *params, batch_tile=128))
    assert logits2.shape == (B2, NUM_CLASSES)
    ref2 = _bf16_reference(x2, w1, b1, w2, b2)
    np.testing.assert_allclose(np.asarray(logits2), np.asarray(ref2),
                               rtol=1e-2, atol=1e-2)

    print("KERNEL_OK")
</pallas_src>

<mosaic_0001>
module attributes {stable_mosaic.version = 11 : i64} {
  func.func @mlp_kernel(%arg0: i32, %arg1: memref<64x784xf32, #tpu.memory_space<vmem>>, %arg2: memref<784x128xbf16, #tpu.memory_space<vmem>>, %arg3: memref<1x128xf32, #tpu.memory_space<vmem>>, %arg4: memref<128x128xbf16, #tpu.memory_space<vmem>>, %arg5: memref<1x128xf32, #tpu.memory_space<vmem>>, %arg6: memref<64x128xbf16, #tpu.memory_space<vmem>>) attributes {dimension_semantics = [#tpu.dimension_semantics<parallel>], iteration_bounds = array<i64: 1>, scalar_prefetch = 0 : i64, scratch_operands = 0 : i64, tpu.core_type = #tpu.core_type<tc>, window_params = [{transform_indices = @transform_0, window_bounds = array<i64: 64, 784>}, {pipeline_mode = #tpu.pipeline_mode<synchronous>, transform_indices = @transform_1, window_bounds = array<i64: 784, 128>}, {pipeline_mode = #tpu.pipeline_mode<synchronous>, transform_indices = @transform_2, window_bounds = array<i64: 1, 128>}, {pipeline_mode = #tpu.pipeline_mode<synchronous>, transform_indices = @transform_3, window_bounds = array<i64: 128, 128>}, {pipeline_mode = #tpu.pipeline_mode<synchronous>, transform_indices = @transform_4, window_bounds = array<i64: 1, 128>}, {transform_indices = @transform_5, window_bounds = array<i64: 64, 128>}]} {
    %c0 = arith.constant 0 : index
    %c0_0 = arith.constant 0 : index
    %0 = vector.load %arg1[%c0, %c0_0] : memref<64x784xf32, #tpu.memory_space<vmem>>, vector<64x784xf32>
    %1 = arith.truncf %0 : vector<64x784xf32> to vector<64x784xbf16>
    %c0_1 = arith.constant 0 : index
    %c0_2 = arith.constant 0 : index
    %2 = vector.load %arg2[%c0_1, %c0_2] : memref<784x128xbf16, #tpu.memory_space<vmem>>, vector<784x128xbf16>
    %cst = arith.constant dense<0.000000e+00> : vector<64x128xf32>
    %3 = tpu.matmul %1, %2, %cst {dimension_numbers = #tpu.dot_dimension_numbers<[1], [0], [0], [1], [0, 0, 1, 1], [], []>} : vector<64x784xbf16>, vector<784x128xbf16>, vector<64x128xf32> -> vector<64x128xf32>
    %c0_3 = arith.constant 0 : index
    %c0_4 = arith.constant 0 : index
    %4 = vector.load %arg3[%c0_3, %c0_4] : memref<1x128xf32, #tpu.memory_space<vmem>>, vector<1x128xf32>
    %5 = vector.broadcast %4 : vector<1x128xf32> to vector<64x128xf32>
    %6 = arith.addf %3, %5 : vector<64x128xf32>
    %cst_5 = arith.constant 0.000000e+00 : f32
    %7 = vector.broadcast %cst_5 : f32 to vector<64x128xf32>
    %8 = arith.maximumf %6, %7 : vector<64x128xf32>
    %9 = arith.truncf %8 : vector<64x128xf32> to vector<64x128xbf16>
    %c0_6 = arith.constant 0 : index
    %c0_7 = arith.constant 0 : index
    %10 = vector.load %arg4[%c0_6, %c0_7] : memref<128x128xbf16, #tpu.memory_space<vmem>>, vector<128x128xbf16>
    %cst_8 = arith.constant dense<0.000000e+00> : vector<64x128xf32>
    %11 = tpu.matmul %9, %10, %cst_8 {dimension_numbers = #tpu.dot_dimension_numbers<[1], [0], [0], [1], [0, 0, 1, 1], [], []>} : vector<64x128xbf16>, vector<128x128xbf16>, vector<64x128xf32> -> vector<64x128xf32>
    %c0_9 = arith.constant 0 : index
    %c0_10 = arith.constant 0 : index
    %12 = vector.load %arg5[%c0_9, %c0_10] : memref<1x128xf32, #tpu.memory_space<vmem>>, vector<1x128xf32>
    %13 = vector.broadcast %12 : vector<1x128xf32> to vector<64x128xf32>
    %14 = arith.addf %11, %13 : vector<64x128xf32>
    %15 = arith.truncf %14 : vector<64x128xf32> to vector<64x128xbf16>
    %c0_11 = arith.constant 0 : index
    %c0_12 = arith.constant 0 : index
    %16 = vector.load %arg6[%c0_11, %c0_12] : memref<64x128xbf16, #tpu.memory_space<vmem>>, vector<64x128xbf16>
    tpu.vector_store %arg6[%c0_11, %c0_12], %15 {strides = array<i32>} : memref<64x128xbf16, #tpu.memory_space<vmem>>, vector<64x128xbf16>,
    return
  }
  func.func @transform_0(%arg0: i32) -> (i32, i32) {
    %c0_i32 = arith.constant 0 : i32
    %c0_i32_0 = arith.constant 0 : i32
    return %arg0, %c0_i32 : i32, i32
  }
  func.func @transform_1(%arg0: i32) -> (i32, i32) {
    %c0_i32 = arith.constant 0 : i32
    %c0_i32_0 = arith.constant 0 : i32
    %c0_i32_1 = arith.constant 0 : i32
    return %c0_i32, %c0_i32_0 : i32, i32
  }
  func.func @transform_2(%arg0: i32) -> (i32, i32) {
    %c0_i32 = arith.constant 0 : i32
    %c0_i32_0 = arith.constant 0 : i32
    %c0_i32_1 = arith.constant 0 : i32
    return %c0_i32, %c0_i32_0 : i32, i32
  }
  func.func @transform_3(%arg0: i32) -> (i32, i32) {
    %c0_i32 = arith.constant 0 : i32
    %c0_i32_0 = arith.constant 0 : i32
    %c0_i32_1 = arith.constant 0 : i32
    return %c0_i32, %c0_i32_0 : i32, i32
  }
  func.func @transform_4(%arg0: i32) -> (i32, i32) {
    %c0_i32 = arith.constant 0 : i32
    %c0_i32_0 = arith.constant 0 : i32
    %c0_i32_1 = arith.constant 0 : i32
    return %c0_i32, %c0_i32_0 : i32, i32
  }
  func.func @transform_5(%arg0: i32) -> (i32, i32) {
    %c0_i32 = arith.constant 0 : i32
    %c0_i32_0 = arith.constant 0 : i32
    return %arg0, %c0_i32 : i32, i32
  }
}

</mosaic_0001>

<llo_original>
// kernel: tpu_custom_call.1
$region0: #{tpu_custom_call.1}
  #allocation0 [shape = 'u32[]', space=smem, size = 0x4, offset = 0x4, fixed_abs, tag = 'smem constant byte address 0x4 - core index']
  #allocation1 [shape = 'u32[144,128]{1,0:T(1,128)}', space=vmem, size = 0x12000, scoped, tag = 'internal scratch']
  %s0 = inlined_call_operand.hbm [shape: f32[64,784], index: 0, kind: input, shape index: {}]
  %s1 = inlined_call_operand.hbm [shape: bf16[784,128], index: 1, kind: input, shape index: {}]
  %s2 = inlined_call_operand.vmem [shape: f32[1,128], index: 2, kind: input, shape index: {}]
  %s3 = inlined_call_operand.hbm [shape: bf16[128,128], index: 3, kind: input, shape index: {}]
  %s4 = inlined_call_operand.vmem [shape: f32[1,128], index: 4, kind: input, shape index: {}]
  %s5 = inlined_call_operand.hbm [shape: bf16[64,128], index: 5, kind: output, shape index: {}]
  %s6 = sld [smem:[#allocation0]]
  $region42: #{tpu_custom_call.1} parent=0
    _
  %s8 = ssub.s32 1, %s6
  %s9 = scalar_select 0, %s8, %s6
  $region1: #{tpu_custom_call.1} parent=0
    #allocation2 [shape = 'u8[229376]{0}', space=vmem, size = 0x38000, scoped, tag = 'input window, operand 0, single buffered']
    #allocation3 [shape = 's32[1]{0}', space=sflag, size = 0x4, scoped, tag = 'scoped memory for tpu_custom_call.1']
    #allocation4 [shape = 's32[1]{0}', space=sflag, size = 0x4, scoped, tag = 'scoped memory for tpu_custom_call.1']
    #allocation5 [shape = 'u8[200704]{0}', space=vmem, size = 0x31000, scoped, tag = 'input window, operand 1, single buffered']
    #allocation6 [shape = 's32[1]{0}', space=sflag, size = 0x4, scoped, tag = 'scoped memory for tpu_custom_call.1']
    #allocation7 [shape = 'u8[32768]{0}', space=vmem, size = 0x8000, scoped, tag = 'input window, operand 3, single buffered']
    #allocation8 [shape = 'u8[16384]{0}', space=vmem, size = 0x4000, scoped, tag = 'output window, operand 0, single buffered']
    %10 = vsyncpa [#allocation3], 0
    %11 = vsyncpa [#allocation6], 0
    %12 = vsyncpa [#allocation4], 0
    // Predicated region
    $region2: #{tpu_custom_call.1} parent=1 // pred_check
      _
    $region3: #{tpu_custom_call.1} parent=1 // pred_check_branch
      %14 = sbr.rel (0) target = $region5
    $region4: #{tpu_custom_call.1} parent=1 // pred_region
      %s16 = ssub.s32 7168, 7168
      %17 = vsyncadd [#allocation3], %s16
      %s18 = sshll.u32 [#allocation2], 4
      %s19 = int_to_ptr.vmem [resolvable:$true] %s18
      %24 = dma.hbm_to_vmem [thread:$0]  %s0, 7168, %s19, [#allocation3], 896, 896, 56
    $region5: #{tpu_custom_call.1} parent=1 // pred_fallthru
      _
    // Predicated region
    $region6: #{tpu_custom_call.1} parent=1 // pred_check
      _
    $region7: #{tpu_custom_call.1} parent=1 // pred_check_branch
      %26 = sbr.rel (0) target = $region9
    $region8: #{tpu_custom_call.1} parent=1 // pred_region
      %s28 = ssub.s32 6272, 6272
      %29 = vsyncadd [#allocation6], %s28
      %s30 = sshll.u32 [#allocation5], 4
      %s31 = int_to_ptr.vmem [resolvable:$true] %s30
      %36 = dma.hbm_to_vmem [thread:$0]  %s1, 6272, %s31, [#allocation6], 64, 64, 4
    $region9: #{tpu_custom_call.1} parent=1 // pred_fallthru
      _
    // Predicated region
    $region10: #{tpu_custom_call.1} parent=1 // pred_check
      _
    $region11: #{tpu_custom_call.1} parent=1 // pred_check_branch
      %38 = sbr.rel (0) target = $region13
    $region12: #{tpu_custom_call.1} parent=1 // pred_region
      _
    $region13: #{tpu_custom_call.1} parent=1 // pred_fallthru
      _
    // Predicated region
    $region14: #{tpu_custom_call.1} parent=1 // pred_check
      _
    $region15: #{tpu_custom_call.1} parent=1 // pred_check_branch
      %40 = sbr.rel (0) target = $region17
    $region16: #{tpu_custom_call.1} parent=1 // pred_region
      %s42 = ssub.s32 1024, 1024
      %43 = vsyncadd [#allocation6], %s42
      %s44 = sshll.u32 [#allocation7], 4
      %s45 = int_to_ptr.vmem [resolvable:$true] %s44
      %50 = dma.hbm_to_vmem [thread:$0]  %s3, 1024, %s45, [#allocation6], 64, 64, 4
    $region17: #{tpu_custom_call.1} parent=1 // pred_fallthru
      _
    // Predicated region
    $region18: #{tpu_custom_call.1} parent=1 // pred_check
      _
    $region19: #{tpu_custom_call.1} parent=1 // pred_check_branch
      %52 = sbr.rel (0) target = $region21
    $region20: #{tpu_custom_call.1} parent=1 // pred_region
      _
    $region21: #{tpu_custom_call.1} parent=1 // pred_fallthru
      _
    // Predicated region
    $region22: #{tpu_custom_call.1} parent=1 // pred_check
      _
    $region23: #{tpu_custom_call.1} parent=1 // pred_check_branch
      %54 = sbr.rel (0) target = $region25
    $region24: #{tpu_custom_call.1} parent=1 // pred_region
      %55 = dma.done [#allocation3], 7168
    $region25: #{tpu_custom_call.1} parent=1 // pred_fallthru
      _
    // Predicated region
    $region26: #{tpu_custom_call.1} parent=1 // pred_check
      _
    $region27: #{tpu_custom_call.1} parent=1 // pred_check_branch
      %57 = sbr.rel (0) target = $region29
    $region28: #{tpu_custom_call.1} parent=1 // pred_region
      %58 = dma.done [#allocation6], 6272
    $region29: #{tpu_custom_call.1} parent=1 // pred_fallthru
      _
    // Predicated region
    $region30: #{tpu_custom_call.1} parent=1 // pred_check
      _
    $region31: #{tpu_custom_call.1} parent=1 // pred_check_branch
      %60 = sbr.rel (0) target = $region33
    $region32: #{tpu_custom_call.1} parent=1 // pred_region
      %61 = dma.done [#allocation6], 1024
    $region33: #{tpu_custom_call.1} parent=1 // pred_fallthru
      _
    %v63 = vld [vmem:[#allocation2] sm:$0xff]
    %v64 = vld [vmem:[#allocation2 + $0x8] sm:$0xff]
    %v65 = vld [vmem:[#allocation2 + $0x10] sm:$0xff]
    %v66 = vld [vmem:[#allocation2 + $0x18] sm:$0xff]
    %v67 = vld [vmem:[#allocation2 + $0x20] sm:$0xff]
    %v68 = vld [vmem:[#allocation2 + $0x28] sm:$0xff]
    %v69 = vld [vmem:[#allocation2 + $0x30] sm:$0xff]
    %v70 = vld [vmem:[#allocation2 + $0x38] sm:$0xff]
    %v71 = vld [vmem:[#allocation2 + $0x40] sm:$0xff]
    %v72 = vld [vmem:[#allocation2 + $0x48] sm:$0xff]
    %v73 = vld [vmem:[#allocation2 + $0x50] sm:$0xff]
    %v74 = vld [vmem:[#allocation2 + $0x58] sm:$0xff]
    %v75 = vld [vmem:[#allocation2 + $0x60] sm:$0xff]
    %v76 = vld [vmem:[#allocation2 + $0x68] sm:$0xff]
    %v77 = vld [vmem:[#allocation2 + $0x70] sm:$0xff]
    %v78 = vld [vmem:[#allocation2 + $0x78] sm:$0xff]
    %v79 = vld [vmem:[#allocation2 + $0x80] sm:$0xff]
    %v80 = vld [vmem:[#allocation2 + $0x88] sm:$0xff]
    %v81 = vld [vmem:[#allocation2 + $0x90] sm:$0xff]
    %v82 = vld [vmem:[#allocation2 + $0x98] sm:$0xff]
    %v83 = vld [vmem:[#allocation2 + $0xa0] sm:$0xff]
    %v84 = vld [vmem:[#allocation2 + $0xa8] sm:$0xff]
    %v85 = vld [vmem:[#allocation2 + $0xb0] sm:$0xff]
    %v86 = vld [vmem:[#allocation2 + $0xb8] sm:$0xff]
    %v87 = vld [vmem:[#allocation2 + $0xc0] sm:$0xff]
    %v88 = vld [vmem:[#allocation2 + $0xc8] sm:$0xff]
    %v89 = vld [vmem:[#allocation2 + $0xd0] sm:$0xff]
    %v90 = vld [vmem:[#allocation2 + $0xd8] sm:$0xff]
    %v91 = vld [vmem:[#allocation2 + $0xe0] sm:$0xff]
    %v92 = vld [vmem:[#allocation2 + $0xe8] sm:$0xff]
    %v93 = vld [vmem:[#allocation2 + $0xf0] sm:$0xff]
    %v94 = vld [vmem:[#allocation2 + $0xf8] sm:$0xff]
    %v95 = vld [vmem:[#allocation2 + $0x100] sm:$0xff]
    %v96 = vld [vmem:[#allocation2 + $0x108] sm:$0xff]
    %v97 = vld [vmem:[#allocation2 + $0x110] sm:$0xff]
    %v98 = vld [vmem:[#allocation2 + $0x118] sm:$0xff]
    %v99 = vld [vmem:[#allocation2 + $0x120] sm:$0xff]
    %v100 = vld [vmem:[#allocation2 + $0x128] sm:$0xff]
    %v101 = vld [vmem:[#allocation2 + $0x130] sm:$0xff]
    %v102 = vld [vmem:[#allocation2 + $0x138] sm:$0xff]
    %v103 = vld [vmem:[#allocation2 + $0x140] sm:$0xff]
    %v104 = vld [vmem:[#allocation2 + $0x148] sm:$0xff]
    %v105 = vld [vmem:[#allocation2 + $0x150] sm:$0xff]
    %v106 = vld [vmem:[#allocation2 + $0x158] sm:$0xff]
    %v107 = vld [vmem:[#allocation2 + $0x160] sm:$0xff]
    %v108 = vld [vmem:[#allocation2 + $0x168] sm:$0xff]
    %v109 = vld [vmem:[#allocation2 + $0x170] sm:$0xff]
    %v110 = vld [vmem:[#allocation2 + $0x178] sm:$0xff]
    %v111 = vld [vmem:[#allocation2 + $0x180] sm:$0xff]
    %v112 = vld [vmem:[#allocation2 + $0x188] sm:$0xff]
    %v113 = vld [vmem:[#allocation2 + $0x190] sm:$0xff]
    %v114 = vld [vmem:[#allocation2 + $0x198] sm:$0xff]
    %v115 = vld [vmem:[#allocation2 + $0x1a0] sm:$0xff]
    %v116 = vld [vmem:[#allocation2 + $0x1a8] sm:$0xff]
    %v117 = vld [vmem:[#allocation2 + $0x1b0] sm:$0xff]
    %v118 = vld [vmem:[#allocation2 + $0x1b8] sm:$0xff]
    %v119 = vpack.c.bf16 %v70, %v63
    %v120 = vpack.c.bf16 %v71, %v64
    %v121 = vpack.c.bf16 %v72, %v65
    %v122 = vpack.c.bf16 %v73, %v66
    %v123 = vpack.c.bf16 %v74, %v67
    %v124 = vpack.c.bf16 %v75, %v68
    %v125 = vpack.c.bf16 %v76, %v69
    %v126 = vpack.c.bf16 %v84, %v77
    %v127 = vpack.c.bf16 %v85, %v78
    %v128 = vpack.c.bf16 %v86, %v79
    %v129 = vpack.c.bf16 %v87, %v80
    %v130 = vpack.c.bf16 %v88, %v81
    %v131 = vpack.c.bf16 %v89, %v82
    %v132 = vpack.c.bf16 %v90, %v83
    %v133 = vpack.c.bf16 %v98, %v91
    %v134 = vpack.c.bf16 %v99, %v92
    %v135 = vpack.c.bf16 %v100, %v93
    %v136 = vpack.c.bf16 %v101, %v94
    %v137 = vpack.c.bf16 %v102, %v95
    %v138 = vpack.c.bf16 %v103, %v96
    %v139 = vpack.c.bf16 %v104, %v97
    %v140 = vpack.c.bf16 %v112, %v105
    %v141 = vpack.c.bf16 %v113, %v106
    %v142 = vpack.c.bf16 %v114, %v107
    %v143 = vpack.c.bf16 %v115, %v108
    %v144 = vpack.c.bf16 %v116, %v109
    %v145 = vpack.c.bf16 %v117, %v110
    %v146 = vpack.c.bf16 %v118, %v111
    %v147 = vld [vmem:[#allocation5] sm:$0xf]
    %v148 = vld [vmem:[#allocation5 + $0x4] sm:$0xf]
    %v149 = vld [vmem:[#allocation5 + $0x8] sm:$0xf]
    %v150 = vld [vmem:[#allocation5 + $0xc] sm:$0xf]
    %v151 = vld [vmem:[#allocation5 + $0x10] sm:$0xf]
    %v152 = vld [vmem:[#allocation5 + $0x14] sm:$0xf]
    %v153 = vld [vmem:[#allocation5 + $0x18] sm:$0xf]
    %v154 = vld [vmem:[#allocation5 + $0x1c] sm:$0xf]
    %v155 = vld [vmem:[#allocation5 + $0x20] sm:$0xf]
    %v156 = vld [vmem:[#allocation5 + $0x24] sm:$0xf]
    %v157 = vld [vmem:[#allocation5 + $0x28] sm:$0xf]
    %v158 = vld [vmem:[#allocation5 + $0x2c] sm:$0xf]
    %v159 = vld [vmem:[#allocation5 + $0x30] sm:$0xf]
    %v160 = vld [vmem:[#allocation5 + $0x34] sm:$0xf]
    %v161 = vld [vmem:[#allocation5 + $0x38] sm:$0xf]
    %v162 = vld [vmem:[#allocation5 + $0x3c] sm:$0xf]
    %v163 = vld [vmem:[#allocation5 + $0x40] sm:$0xf]
    %v164 = vld [vmem:[#allocation5 + $0x44] sm:$0xf]
    %v165 = vld [vmem:[#allocation5 + $0x48] sm:$0xf]
    %v166 = vld [vmem:[#allocation5 + $0x4c] sm:$0xf]
    %v167 = vld [vmem:[#allocation5 + $0x50] sm:$0xf]
    %v168 = vld [vmem:[#allocation5 + $0x54] sm:$0xf]
    %v169 = vld [vmem:[#allocation5 + $0x58] sm:$0xf]
    %v170 = vld [vmem:[#allocation5 + $0x5c] sm:$0xf]
    %v171 = vld [vmem:[#allocation5 + $0x60] sm:$0xf]
    %v172 = vld [vmem:[#allocation5 + $0x64] sm:$0xf]
    %v173 = vld [vmem:[#allocation5 + $0x68] sm:$0xf]
    %v174 = vld [vmem:[#allocation5 + $0x6c] sm:$0xf]
    %v175 = vld [vmem:[#allocation5 + $0x70] sm:$0xf]
    %v176 = vld [vmem:[#allocation5 + $0x74] sm:$0xf]
    %v177 = vld [vmem:[#allocation5 + $0x78] sm:$0xf]
    %v178 = vld [vmem:[#allocation5 + $0x7c] sm:$0xf]
    %v179 = vld [vmem:[#allocation5 + $0x80] sm:$0xf]
    %v180 = vld [vmem:[#allocation5 + $0x84] sm:$0xf]
    %v181 = vld [vmem:[#allocation5 + $0x88] sm:$0xf]
    %v182 = vld [vmem:[#allocation5 + $0x8c] sm:$0xf]
    %v183 = vld [vmem:[#allocation5 + $0x90] sm:$0xf]
    %v184 = vld [vmem:[#allocation5 + $0x94] sm:$0xf]
    %v185 = vld [vmem:[#allocation5 + $0x98] sm:$0xf]
    %v186 = vld [vmem:[#allocation5 + $0x9c] sm:$0xf]
    %v187 = vld [vmem:[#allocation5 + $0xa0] sm:$0xf]
    %v188 = vld [vmem:[#allocation5 + $0xa4] sm:$0xf]
    %v189 = vld [vmem:[#allocation5 + $0xa8] sm:$0xf]
    %v190 = vld [vmem:[#allocation5 + $0xac] sm:$0xf]
    %v191 = vld [vmem:[#allocation5 + $0xb0] sm:$0xf]
    %v192 = vld [vmem:[#allocation5 + $0xb4] sm:$0xf]
    %v193 = vld [vmem:[#allocation5 + $0xb8] sm:$0xf]
    %v194 = vld [vmem:[#allocation5 + $0xbc] sm:$0xf]
    %v195 = vld [vmem:[#allocation5 + $0xc0] sm:$0xf]
    %v196 = vld [vmem:[#allocation5 + $0xc4] sm:$0xf]
    %v197 = vld [vmem:[#allocation5 + $0xc8] sm:$0xf]
    %v198 = vld [vmem:[#allocation5 + $0xcc] sm:$0xf]
    %v199 = vld [vmem:[#allocation5 + $0xd0] sm:$0xf]
    %v200 = vld [vmem:[#allocation5 + $0xd4] sm:$0xf]
    %v201 = vld [vmem:[#allocation5 + $0xd8] sm:$0xf]
    %v202 = vld [vmem:[#allocation5 + $0xdc] sm:$0xf]
    %v203 = vld [vmem:[#allocation5 + $0xe0] sm:$0xf]
    %v204 = vld [vmem:[#allocation5 + $0xe4] sm:$0xf]
    %v205 = vld [vmem:[#allocation5 + $0xe8] sm:$0xf]
    %v206 = vld [vmem:[#allocation5 + $0xec] sm:$0xf]
    %v207 = vld [vmem:[#allocation5 + $0xf0] sm:$0xf]
    %v208 = vld [vmem:[#allocation5 + $0xf4] sm:$0xf]
    %v209 = vld [vmem:[#allocation5 + $0xf8] sm:$0xf]
    %v210 = vld [vmem:[#allocation5 + $0xfc] sm:$0xf]
    %v211 = vld [vmem:[#allocation5 + $0x100] sm:$0xf]
    %v212 = vld [vmem:[#allocation5 + $0x104] sm:$0xf]
    %v213 = vld [vmem:[#allocation5 + $0x108] sm:$0xf]
    %v214 = vld [vmem:[#allocation5 + $0x10c] sm:$0xf]
    %v215 = vld [vmem:[#allocation5 + $0x110] sm:$0xf]
    %v216 = vld [vmem:[#allocation5 + $0x114] sm:$0xf]
    %v217 = vld [vmem:[#allocation5 + $0x118] sm:$0xf]
    %v218 = vld [vmem:[#allocation5 + $0x11c] sm:$0xf]
    %v219 = vld [vmem:[#allocation5 + $0x120] sm:$0xf]
    %v220 = vld [vmem:[#allocation5 + $0x124] sm:$0xf]
    %v221 = vld [vmem:[#allocation5 + $0x128] sm:$0xf]
    %v222 = vld [vmem:[#allocation5 + $0x12c] sm:$0xf]
    %v223 = vld [vmem:[#allocation5 + $0x130] sm:$0xf]
    %v224 = vld [vmem:[#allocation5 + $0x134] sm:$0xf]
    %v225 = vld [vmem:[#allocation5 + $0x138] sm:$0xf]
    %v226 = vld [vmem:[#allocation5 + $0x13c] sm:$0xf]
    %v227 = vld [vmem:[#allocation5 + $0x140] sm:$0xf]
    %v228 = vld [vmem:[#allocation5 + $0x144] sm:$0xf]
    %v229 = vld [vmem:[#allocation5 + $0x148] sm:$0xf]
    %v230 = vld [vmem:[#allocation5 + $0x14c] sm:$0xf]
    %v231 = vld [vmem:[#allocation5 + $0x150] sm:$0xf]
    %v232 = vld [vmem:[#allocation5 + $0x154] sm:$0xf]
    %v233 = vld [vmem:[#allocation5 + $0x158] sm:$0xf]
    %v234 = vld [vmem:[#allocation5 + $0x15c] sm:$0xf]
    %v235 = vld [vmem:[#allocation5 + $0x160] sm:$0xf]
    %v236 = vld [vmem:[#allocation5 + $0x164] sm:$0xf]
    %v237 = vld [vmem:[#allocation5 + $0x168] sm:$0xf]
    %v238 = vld [vmem:[#allocation5 + $0x16c] sm:$0xf]
    %v239 = vld [vmem:[#allocation5 + $0x170] sm:$0xf]
    %v240 = vld [vmem:[#allocation5 + $0x174] sm:$0xf]
    %v241 = vld [vmem:[#allocation5 + $0x178] sm:$0xf]
    %v242 = vld [vmem:[#allocation5 + $0x17c] sm:$0xf]
    %v243 = vld [vmem:[#allocation5 + $0x180] sm:$0xf]
    %v244 = vld [vmem:[#allocation5 + $0x184] sm:$0xf]
    %v245 = vld [vmem:[%s2] sm:$0x1]
    %v247 = vlaneseq
    %v248 = vshrl.u32 %v247, 7
    %v249 = vsub.s32 0, %v248
    %v250 = vrot.slane %v245, %v249
    %v350 = vunpack.c.l.b16 %v147
    %v351 = vunpack.c.l.b16 %v148
    %v352 = vunpack.c.l.b16 %v149
    %v353 = vunpack.c.l.b16 %v150
    %v354 = vunpack.c.l.b16 %v151
    %v355 = vunpack.c.l.b16 %v152
    %v356 = vunpack.c.l.b16 %v153
    %v357 = vunpack.c.l.b16 %v154
    %v358 = vunpack.c.l.b16 %v155
    %v359 = vunpack.c.l.b16 %v156
    %v360 = vunpack.c.l.b16 %v157
    %v361 = vunpack.c.l.b16 %v158
    %v362 = vunpack.c.l.b16 %v159
    %v363 = vunpack.c.l.b16 %v160
    %v364 = vunpack.c.l.b16 %v161
    %v365 = vunpack.c.l.b16 %v162
    %v366 = vunpack.c.l.b16 %v163
    %v367 = vunpack.c.l.b16 %v164
    %v368 = vunpack.c.l.b16 %v165
    %v369 = vunpack.c.l.b16 %v166
    %v370 = vunpack.c.l.b16 %v167
    %v371 = vunpack.c.l.b16 %v168
    %v372 = vunpack.c.l.b16 %v169
    %v373 = vunpack.c.l.b16 %v170
    %v374 = vunpack.c.l.b16 %v171
    %v375 = vunpack.c.l.b16 %v172
    %v376 = vunpack.c.l.b16 %v173
    %v377 = vunpack.c.l.b16 %v174
    %v378 = vunpack.c.l.b16 %v175
    %v379 = vunpack.c.l.b16 %v176
    %v380 = vunpack.c.l.b16 %v177
    %v381 = vunpack.c.l.b16 %v178
    %v382 = vunpack.c.l.b16 %v179
    %v383 = vunpack.c.l.b16 %v180
    %v384 = vunpack.c.l.b16 %v181
    %v385 = vunpack.c.l.b16 %v182
    %v386 = vunpack.c.l.b16 %v183
    %v387 = vunpack.c.l.b16 %v184
    %v388 = vunpack.c.l.b16 %v185
    %v389 = vunpack.c.l.b16 %v186
    %v390 = vunpack.c.l.b16 %v187
    %v391 = vunpack.c.l.b16 %v188
    %v392 = vunpack.c.l.b16 %v189
    %v393 = vunpack.c.l.b16 %v190
    %v394 = vunpack.c.l.b16 %v191
    %v395 = vunpack.c.l.b16 %v192
    %v396 = vunpack.c.l.b16 %v193
    %v397 = vunpack.c.l.b16 %v194
    %v398 = vunpack.c.l.b16 %v195
    %v399 = vunpack.c.l.b16 %v196
    %v400 = vunpack.c.l.b16 %v197
    %v401 = vunpack.c.l.b16 %v198
    %v402 = vunpack.c.l.b16 %v199
    %v403 = vunpack.c.l.b16 %v200
    %v404 = vunpack.c.l.b16 %v201
    %v405 = vunpack.c.l.b16 %v202
    %v406 = vunpack.c.l.b16 %v203
    %v407 = vunpack.c.l.b16 %v204
    %v408 = vunpack.c.l.b16 %v205
    %v409 = vunpack.c.l.b16 %v206
    %v410 = vunpack.c.l.b16 %v207
    %v411 = vunpack.c.l.b16 %v208
    %v412 = vunpack.c.l.b16 %v209
    %v413 = vunpack.c.l.b16 %v210
    %v414 = vunpack.c.l.b16 %v211
    %v415 = vunpack.c.l.b16 %v212
    %v416 = vunpack.c.l.b16 %v213
    %v417 = vunpack.c.l.b16 %v214
    %v418 = vunpack.c.l.b16 %v215
    %v419 = vunpack.c.l.b16 %v216
    %v420 = vunpack.c.l.b16 %v217
    %v421 = vunpack.c.l.b16 %v218
    %v422 = vunpack.c.l.b16 %v219
    %v423 = vunpack.c.l.b16 %v220
    %v424 = vunpack.c.l.b16 %v221
    %v425 = vunpack.c.l.b16 %v222
    %v426 = vunpack.c.l.b16 %v223
    %v427 = vunpack.c.l.b16 %v224
    %v428 = vunpack.c.l.b16 %v225
    %v429 = vunpack.c.l.b16 %v226
    %v430 = vunpack.c.l.b16 %v227
    %v431 = vunpack.c.l.b16 %v228
    %v432 = vunpack.c.l.b16 %v229
    %v433 = vunpack.c.l.b16 %v230
    %v434 = vunpack.c.l.b16 %v231
    %v435 = vunpack.c.l.b16 %v232
    %v436 = vunpack.c.l.b16 %v233
    %v437 = vunpack.c.l.b16 %v234
    %v438 = vunpack.c.l.b16 %v235
    %v439 = vunpack.c.l.b16 %v236
    %v440 = vunpack.c.l.b16 %v237
    %v441 = vunpack.c.l.b16 %v238
    %v442 = vunpack.c.l.b16 %v239
    %v443 = vunpack.c.l.b16 %v240
    %v444 = vunpack.c.l.b16 %v241
    %v445 = vunpack.c.l.b16 %v242
    %v446 = vunpack.c.l.b16 %v243
    %v447 = vunpack.c.l.b16 %v244
    %v448 = vpack.c.b16 %v351, %v350
    %v449 = vpack.c.b16 %v353, %v352
    %v450 = vpack.c.b16 %v355, %v354
    %v451 = vpack.c.b16 %v357, %v356
    %v452 = vpack.c.b16 %v359, %v358
    %v453 = vpack.c.b16 %v361, %v360
    %v454 = vpack.c.b16 %v363, %v362
    %v455 = vpack.c.b16 %v365, %v364
    %v456 = vpack.c.b16 %v367, %v366
    %v457 = vpack.c.b16 %v369, %v368
    %v458 = vpack.c.b16 %v371, %v370
    %v459 = vpack.c.b16 %v373, %v372
    %v460 = vpack.c.b16 %v375, %v374
    %v461 = vpack.c.b16 %v377, %v376
    %v462 = vpack.c.b16 %v379, %v378
    %v463 = vpack.c.b16 %v381, %v380
    %v464 = vpack.c.b16 %v383, %v382
    %v465 = vpack.c.b16 %v385, %v384
    %v466 = vpack.c.b16 %v387, %v386
    %v467 = vpack.c.b16 %v389, %v388
    %v468 = vpack.c.b16 %v391, %v390
    %v469 = vpack.c.b16 %v393, %v392
    %v470 = vpack.c.b16 %v395, %v394
    %v471 = vpack.c.b16 %v397, %v396
    %v472 = vpack.c.b16 %v399, %v398
    %v473 = vpack.c.b16 %v401, %v400
    %v474 = vpack.c.b16 %v403, %v402
    %v475 = vpack.c.b16 %v405, %v404
    %v476 = vpack.c.b16 %v407, %v406
    %v477 = vpack.c.b16 %v409, %v408
    %v478 = vpack.c.b16 %v411, %v410
    %v479 = vpack.c.b16 %v413, %v412
    %v480 = vpack.c.b16 %v415, %v414
    %v481 = vpack.c.b16 %v417, %v416
    %v482 = vpack.c.b16 %v419, %v418
    %v483 = vpack.c.b16 %v421, %v420
    %v484 = vpack.c.b16 %v423, %v422
    %v485 = vpack.c.b16 %v425, %v424
    %v486 = vpack.c.b16 %v427, %v426
    %v487 = vpack.c.b16 %v429, %v428
    %v488 = vpack.c.b16 %v431, %v430
    %v489 = vpack.c.b16 %v433, %v432
    %v490 = vpack.c.b16 %v435, %v434
    %v491 = vpack.c.b16 %v437, %v436
    %v492 = vpack.c.b16 %v439, %v438
    %v493 = vpack.c.b16 %v441, %v440
    %v494 = vpack.c.b16 %v443, %v442
    %v495 = vpack.c.b16 %v445, %v444
    %v496 = vpack.c.b16 %v447, %v446
    %vm546 = vcmask 130048
    %v548 = vsel %vm546, %v125, 0
    %v551 = vsel %vm546, %v132, 0
    %v554 = vsel %vm546, %v139, 0
    %v557 = vsel %vm546, %v146, 0
    %559 = vmatprep.subr.bf16.mxu0 0
    %560 = vmatpush1.bf16.msra.mxu0 %v448
    %561 = vmatprep.subr.bf16.mxu0 0
    %562 = vmatpush1.bf16.msra.mxu0 %v449
    %563 = vmatprep.subr.bf16.mxu0 0
    %564 = vmatpush1.bf16.msra.mxu0 %v450
    %565 = vmatprep.subr.bf16.mxu0 0
    %566 = vmatpush1.bf16.msra.mxu0 %v451
    %567 = vmatprep.subr.bf16.mxu0 0
    %568 = vmatpush1.bf16.msra.mxu0 %v452
    %569 = vmatprep.subr.bf16.mxu0 0
    %570 = vmatpush1.bf16.msra.mxu0 %v453
    %571 = vmatprep.subr.bf16.mxu0 0
    %572 = vmatpush1.bf16.msra.mxu0 %v454
    %573 = vmatprep.subr.bf16.mxu0 0
    %574 = vmatpush1.bf16.msra.mxu0 %v455
    %575 = vmatprep.subr.bf16.mxu0 0
    %576 = vmatpush1.bf16.msra.mxu0 %v456
    %577 = vmatprep.subr.bf16.mxu0 0
    %578 = vmatpush1.bf16.msra.mxu0 %v457
    %579 = vmatprep.subr.bf16.mxu0 0
    %580 = vmatpush1.bf16.msra.mxu0 %v458
    %581 = vmatprep.subr.bf16.mxu0 0
    %582 = vmatpush1.bf16.msra.mxu0 %v459
    %583 = vmatprep.subr.bf16.mxu0 0
    %584 = vmatpush1.bf16.msra.mxu0 %v460
    %585 = vmatprep.subr.bf16.mxu0 0
    %586 = vmatpush1.bf16.msra.mxu0 %v461
    %587 = vmatprep.subr.bf16.mxu0 0
    %588 = vmatpush1.bf16.msra.mxu0 %v462
    %589 = vmatprep.subr.bf16.mxu0 0
    %590 = vmatpush1.bf16.msra.mxu0 %v463
    %591 = vmatprep.mubr.bf16.mxu0 %v120
    %592 = vmatmul.mubr.bf16.gmra.mrb[0].mxu0 %v119
    %v593 = vpop.f32.mrb[0].mxu0
    %v594 = vadd.f32 %v250, %v593
    %v595 = vpop.f32.mrb[0].mxu0
    %v596 = vpop.f32.mrb[0].mxu0
    %v597 = vadd.f32 %v250, %v596
    %v598 = vpop.f32.mrb[0].mxu0
    %599 = vmatprep.mubr.bf16.mxu0 %v127
    %600 = vmatmul.mubr.bf16.gmra.mrb[0].mxu0 %v126
    %v601 = vpop.f32.mrb[0].mxu0
    %v602 = vadd.f32 %v250, %v601
    %v603 = vpop.f32.mrb[0].mxu0
    %v604 = vpop.f32.mrb[0].mxu0
    %v605 = vadd.f32 %v250, %v604
    %v606 = vpop.f32.mrb[0].mxu0
    %607 = vmatprep.mubr.bf16.mxu0 %v134
    %608 = vmatmul.mubr.bf16.gmra.mrb[0].mxu0 %v133
    %v609 = vpop.f32.mrb[0].mxu0
    %v610 = vadd.f32 %v250, %v609
    %v611 = vpop.f32.mrb[0].mxu0
    %v612 = vpop.f32.mrb[0].mxu0
    %v613 = vadd.f32 %v250, %v612
    %v614 = vpop.f32.mrb[0].mxu0
    %615 = vmatprep.mubr.bf16.mxu0 %v141
    %616 = vmatmul.mubr.bf16.gmra.mrb[0].mxu0 %v140
    %v617 = vpop.f32.mrb[0].mxu0
    %v618 = vadd.f32 %v250, %v617
    %v619 = vpop.f32.mrb[0].mxu0
    %v620 = vpop.f32.mrb[0].mxu0
    %v621 = vadd.f32 %v250, %v620
    %v622 = vpop.f32.mrb[0].mxu0
    %623 = vdwg.mxu0
    %624 = vmatprep.subr.bf16.mxu0 0
    %625 = vmatpush1.bf16.msra.mxu0 %v464
    %626 = vmatprep.subr.bf16.mxu0 0
    %627 = vmatpush1.bf16.msra.mxu0 %v465
    %628 = vmatprep.subr.bf16.mxu0 0
    %629 = vmatpush1.bf16.msra.mxu0 %v466
    %630 = vmatprep.subr.bf16.mxu0 0
    %631 = vmatpush1.bf16.msra.mxu0 %v467
    %632 = vmatprep.subr.bf16.mxu0 0
    %633 = vmatpush1.bf16.msra.mxu0 %v468
    %634 = vmatprep.subr.bf16.mxu0 0
    %635 = vmatpush1.bf16.msra.mxu0 %v469
    %636 = vmatprep.subr.bf16.mxu0 0
    %637 = vmatpush1.bf16.msra.mxu0 %v470
    %638 = vmatprep.subr.bf16.mxu0 0
    %639 = vmatpush1.bf16.msra.mxu0 %v471
    %640 = vmatprep.subr.bf16.mxu0 0
    %641 = vmatpush1.bf16.msra.mxu0 %v472
    %642 = vmatprep.subr.bf16.mxu0 0
    %643 = vmatpush1.bf16.msra.mxu0 %v473
    %644 = vmatprep.subr.bf16.mxu0 0
    %645 = vmatpush1.bf16.msra.mxu0 %v474
    %646 = vmatprep.subr.bf16.mxu0 0
    %647 = vmatpush1.bf16.msra.mxu0 %v475
    %648 = vmatprep.subr.bf16.mxu0 0
    %649 = vmatpush1.bf16.msra.mxu0 %v476
    %650 = vmatprep.subr.bf16.mxu0 0
    %651 = vmatpush1.bf16.msra.mxu0 %v477
    %652 = vmatprep.subr.bf16.mxu0 0
    %653 = vmatpush1.bf16.msra.mxu0 %v478
    %654 = vmatprep.subr.bf16.mxu0 0
    %655 = vmatpush1.bf16.msra.mxu0 %v479
    %656 = vmatprep.mubr.bf16.mxu0 %v122
    %657 = vmatmul.mubr.bf16.gmra.mrb[0].mxu0 %v121
    %v658 = vpop.f32.mrb[0].mxu0
    %v659 = vadd.f32 %v594, %v658
    %v660 = vpop.f32.mrb[0].mxu0
    %v661 = vpop.f32.mrb[0].mxu0
    %v662 = vadd.f32 %v597, %v661
    %v663 = vpop.f32.mrb[0].mxu0
    %664 = vmatprep.mubr.bf16.mxu0 %v129
    %665 = vmatmul.mubr.bf16.gmra.mrb[0].mxu0 %v128
    %v666 = vpop.f32.mrb[0].mxu0
    %v667 = vadd.f32 %v602, %v666
    %v668 = vpop.f32.mrb[0].mxu0
    %v669 = vpop.f32.mrb[0].mxu0
    %v670 = vadd.f32 %v605, %v669
    %v671 = vpop.f32.mrb[0].mxu0
    %672 = vmatprep.mubr.bf16.mxu0 %v136
    %673 = vmatmul.mubr.bf16.gmra.mrb[0].mxu0 %v135
    %v674 = vpop.f32.mrb[0].mxu0
    %v675 = vadd.f32 %v610, %v674
    %v676 = vpop.f32.mrb[0].mxu0
    %v677 = vpop.f32.mrb[0].mxu0
    %v678 = vadd.f32 %v613, %v677
    %v679 = vpop.f32.mrb[0].mxu0
    %680 = vmatprep.mubr.bf16.mxu0 %v143
    %681 = vmatmul.mubr.bf16.gmra.mrb[0].mxu0 %v142
    %v682 = vpop.f32.mrb[0].mxu0
    %v683 = vadd.f32 %v618, %v682
    %v684 = vpop.f32.mrb[0].mxu0
    %v685 = vpop.f32.mrb[0].mxu0
    %v686 = vadd.f32 %v621, %v685
    %v687 = vpop.f32.mrb[0].mxu0
    %688 = vdwg.mxu0
    %689 = vmatprep.subr.bf16.mxu0 0
    %690 = vmatpush1.bf16.msra.mxu0 %v480
    %691 = vmatprep.subr.bf16.mxu0 0
    %692 = vmatpush1.bf16.msra.mxu0 %v481
    %693 = vmatprep.subr.bf16.mxu0 0
    %694 = vmatpush1.bf16.msra.mxu0 %v482
    %695 = vmatprep.subr.bf16.mxu0 0
    %696 = vmatpush1.bf16.msra.mxu0 %v483
    %697 = vmatprep.subr.bf16.mxu0 0
    %698 = vmatpush1.bf16.msra.mxu0 %v484
    %699 = vmatprep.subr.bf16.mxu0 0
    %700 = vmatpush1.bf16.msra.mxu0 %v485
    %701 = vmatprep.subr.bf16.mxu0 0
    %702 = vmatpush1.bf16.msra.mxu0 %v486
    %703 = vmatprep.subr.bf16.mxu0 0
    %704 = vmatpush1.bf16.msra.mxu0 %v487
    %705 = vmatprep.subr.bf16.mxu0 0
    %706 = vmatpush1.bf16.msra.mxu0 %v488
    %707 = vmatprep.subr.bf16.mxu0 0
    %708 = vmatpush1.bf16.msra.mxu0 %v489
    %709 = vmatprep.subr.bf16.mxu0 0
    %710 = vmatpush1.bf16.msra.mxu0 %v490
    %711 = vmatprep.subr.bf16.mxu0 0
    %712 = vmatpush1.bf16.msra.mxu0 %v491
    %713 = vmatprep.subr.bf16.mxu0 0
    %714 = vmatpush1.bf16.msra.mxu0 %v492
    %715 = vmatprep.subr.bf16.mxu0 0
    %716 = vmatpush1.bf16.msra.mxu0 %v493
    %717 = vmatprep.subr.bf16.mxu0 0
    %718 = vmatpush1.bf16.msra.mxu0 %v494
    %719 = vmatprep.subr.bf16.mxu0 0
    %720 = vmatpush1.bf16.msra.mxu0 %v495
    %721 = vmatprep.mubr.bf16.mxu0 %v124
    %722 = vmatmul.mubr.bf16.gmra.mrb[0].mxu0 %v123
    %v723 = vpop.f32.mrb[0].mxu0
    %v724 = vadd.f32 %v659, %v723
    %v725 = vpop.f32.mrb[0].mxu0
    %v726 = vpop.f32.mrb[0].mxu0
    %v727 = vadd.f32 %v662, %v726
    %v728 = vpop.f32.mrb[0].mxu0
    %729 = vmatprep.mubr.bf16.mxu0 %v131
    %730 = vmatmul.mubr.bf16.gmra.mrb[0].mxu0 %v130
    %v731 = vpop.f32.mrb[0].mxu0
    %v732 = vadd.f32 %v667, %v731
    %v733 = vpop.f32.mrb[0].mxu0
    %v734 = vpop.f32.mrb[0].mxu0
    %v735 = vadd.f32 %v670, %v734
    %v736 = vpop.f32.mrb[0].mxu0
    %737 = vmatprep.mubr.bf16.mxu0 %v138
    %738 = vmatmul.mubr.bf16.gmra.mrb[0].mxu0 %v137
    %v739 = vpop.f32.mrb[0].mxu0
    %v740 = vadd.f32 %v675, %v739
    %v741 = vpop.f32.mrb[0].mxu0
    %v742 = vpop.f32.mrb[0].mxu0
    %v743 = vadd.f32 %v678, %v742
    %v744 = vpop.f32.mrb[0].mxu0
    %745 = vmatprep.mubr.bf16.mxu0 %v145
    %746 = vmatmul.mubr.bf16.gmra.mrb[0].mxu0 %v144
    %v747 = vpop.f32.mrb[0].mxu0
    %v748 = vadd.f32 %v683, %v747
    %v749 = vpop.f32.mrb[0].mxu0
    %v750 = vpop.f32.mrb[0].mxu0
    %v751 = vadd.f32 %v686, %v750
    %v752 = vpop.f32.mrb[0].mxu0
    %753 = vdwg.mxu0
    %754 = vmatprep.subr.bf16.mxu0 0
    %755 = vmatpush1.bf16.msra.mxu0 %v496
    %756 = vmatprep.subr.bf16.mxu0 0
    %757 = vmatpush1.bf16.msra.mxu0 0
    %758 = vmatprep.subr.bf16.mxu0 0
    %759 = vmatpush1.bf16.msra.mxu0 0
    %760 = vmatprep.subr.bf16.mxu0 0
    %761 = vmatpush1.bf16.msra.mxu0 0
    %762 = vmatprep.subr.bf16.mxu0 0
    %763 = vmatpush1.bf16.msra.mxu0 0
    %764 = vmatprep.subr.bf16.mxu0 0
    %765 = vmatpush1.bf16.msra.mxu0 0
    %766 = vmatprep.subr.bf16.mxu0 0
    %767 = vmatpush1.bf16.msra.mxu0 0
    %768 = vmatprep.subr.bf16.mxu0 0
    %769 = vmatpush1.bf16.msra.mxu0 0
    %770 = vmatprep.subr.bf16.mxu0 0
    %771 = vmatpush1.bf16.msra.mxu0 0
    %772 = vmatprep.subr.bf16.mxu0 0
    %773 = vmatpush1.bf16.msra.mxu0 0
    %774 = vmatprep.subr.bf16.mxu0 0
    %775 = vmatpush1.bf16.msra.mxu0 0
    %776 = vmatprep.subr.bf16.mxu0 0
    %777 = vmatpush1.bf16.msra.mxu0 0
    %778 = vmatprep.subr.bf16.mxu0 0
    %779 = vmatpush1.bf16.msra.mxu0 0
    %780 = vmatprep.subr.bf16.mxu0 0
    %781 = vmatpush1.bf16.msra.mxu0 0
    %782 = vmatprep.subr.bf16.mxu0 0
    %783 = vmatpush1.bf16.msra.mxu0 0
    %784 = vmatprep.subr.bf16.mxu0 0
    %785 = vmatpush1.bf16.msra.mxu0 0
    %786 = vmatprep.mubr.bf16.mxu0 0
    %787 = vmatmul.mubr.bf16.gmra.mrb[0].mxu0 %v548
    %v788 = vpop.f32.mrb[0].mxu0
    %v789 = vadd.f32 %v724, %v788
    %v790 = vpop.f32.mrb[0].mxu0
    %v791 = vpop.f32.mrb[0].mxu0
    %v792 = vadd.f32 %v727, %v791
    %v793 = vpop.f32.mrb[0].mxu0
    %794 = vmatprep.mubr.bf16.mxu0 0
    %795 = vmatmul.mubr.bf16.gmra.mrb[0].mxu0 %v551
    %v796 = vpop.f32.mrb[0].mxu0
    %v797 = vadd.f32 %v732, %v796
    %v798 = vpop.f32.mrb[0].mxu0
    %v799 = vpop.f32.mrb[0].mxu0
    %v800 = vadd.f32 %v735, %v799
    %v801 = vpop.f32.mrb[0].mxu0
    %802 = vmatprep.mubr.bf16.mxu0 0
    %803 = vmatmul.mubr.bf16.gmra.mrb[0].mxu0 %v554
    %v804 = vpop.f32.mrb[0].mxu0
    %v805 = vadd.f32 %v740, %v804
    %v806 = vpop.f32.mrb[0].mxu0
    %v807 = vpop.f32.mrb[0].mxu0
    %v808 = vadd.f32 %v743, %v807
    %v809 = vpop.f32.mrb[0].mxu0
    %810 = vmatprep.mubr.bf16.mxu0 0
    %811 = vmatmul.mubr.bf16.gmra.mrb[0].mxu0 %v557
    %v812 = vpop.f32.mrb[0].mxu0
    %v813 = vadd.f32 %v748, %v812
    %v814 = vpop.f32.mrb[0].mxu0
    %v815 = vpop.f32.mrb[0].mxu0
    %v816 = vadd.f32 %v751, %v815
    %v817 = vpop.f32.mrb[0].mxu0
    %818 = vdwg.mxu0
    %v819 = vmax.f32 %v789, 0.0
    %v820 = vmax.f32 %v792, 0.0
    %v821 = vmax.f32 %v797, 0.0
    %v822 = vmax.f32 %v800, 0.0
    %v823 = vmax.f32 %v805, 0.0
    %v824 = vmax.f32 %v808, 0.0
    %v825 = vmax.f32 %v813, 0.0
    %v826 = vmax.f32 %v816, 0.0
    %v827 = vpack.c.bf16 %v820, %v819
    %v828 = vpack.c.bf16 %v822, %v821
    %v829 = vpack.c.bf16 %v824, %v823
    %v830 = vpack.c.bf16 %v826, %v825
    %v831 = vld [vmem:[#allocation7] sm:$0xf]
    %v832 = vld [vmem:[#allocation7 + $0x4] sm:$0xf]
    %v833 = vld [vmem:[#allocation7 + $0x8] sm:$0xf]
    %v834 = vld [vmem:[#allocation7 + $0xc] sm:$0xf]
    %v835 = vld [vmem:[#allocation7 + $0x10] sm:$0xf]
    %v836 = vld [vmem:[#allocation7 + $0x14] sm:$0xf]
    %v837 = vld [vmem:[#allocation7 + $0x18] sm:$0xf]
    %v838 = vld [vmem:[#allocation7 + $0x1c] sm:$0xf]
    %v839 = vld [vmem:[#allocation7 + $0x20] sm:$0xf]
    %v840 = vld [vmem:[#allocation7 + $0x24] sm:$0xf]
    %v841 = vld [vmem:[#allocation7 + $0x28] sm:$0xf]
    %v842 = vld [vmem:[#allocation7 + $0x2c] sm:$0xf]
    %v843 = vld [vmem:[#allocation7 + $0x30] sm:$0xf]
    %v844 = vld [vmem:[#allocation7 + $0x34] sm:$0xf]
    %v845 = vld [vmem:[#allocation7 + $0x38] sm:$0xf]
    %v846 = vld [vmem:[#allocation7 + $0x3c] sm:$0xf]
    %v847 = vld [vmem:[%s4] sm:$0x1]
    %v849 = vlaneseq
    %v850 = vshrl.u32 %v849, 7
    %v851 = vsub.s32 0, %v850
    %v852 = vrot.slane %v847, %v851
    %v870 = vunpack.c.l.b16 %v831
    %v871 = vunpack.c.l.b16 %v832
    %v872 = vunpack.c.l.b16 %v833
    %v873 = vunpack.c.l.b16 %v834
    %v874 = vunpack.c.l.b16 %v835
    %v875 = vunpack.c.l.b16 %v836
    %v876 = vunpack.c.l.b16 %v837
    %v877 = vunpack.c.l.b16 %v838
    %v878 = vunpack.c.l.b16 %v839
    %v879 = vunpack.c.l.b16 %v840
    %v880 = vunpack.c.l.b16 %v841
    %v881 = vunpack.c.l.b16 %v842
    %v882 = vunpack.c.l.b16 %v843
    %v883 = vunpack.c.l.b16 %v844
    %v884 = vunpack.c.l.b16 %v845
    %v885 = vunpack.c.l.b16 %v846
    %v886 = vpack.c.b16 %v871, %v870
    %v887 = vpack.c.b16 %v873, %v872
    %v888 = vpack.c.b16 %v875, %v874
    %v889 = vpack.c.b16 %v877, %v876
    %v890 = vpack.c.b16 %v879, %v878
    %v891 = vpack.c.b16 %v881, %v880
    %v892 = vpack.c.b16 %v883, %v882
    %v893 = vpack.c.b16 %v885, %v884
    %902 = vmatprep.subr.bf16.mxu0 0
    %903 = vmatpush1.bf16.msra.mxu0 %v886
    %904 = vmatprep.subr.bf16.mxu0 0
    %905 = vmatpush1.bf16.msra.mxu0 %v887
    %906 = vmatprep.subr.bf16.mxu0 0
    %907 = vmatpush1.bf16.msra.mxu0 %v888
    %908 = vmatprep.subr.bf16.mxu0 0
    %909 = vmatpush1.bf16.msra.mxu0 %v889
    %910 = vmatprep.subr.bf16.mxu0 0
    %911 = vmatpush1.bf16.msra.mxu0 %v890
    %912 = vmatprep.subr.bf16.mxu0 0
    %913 = vmatpush1.bf16.msra.mxu0 %v891
    %914 = vmatprep.subr.bf16.mxu0 0
    %915 = vmatpush1.bf16.msra.mxu0 %v892
    %916 = vmatprep.subr.bf16.mxu0 0
    %917 = vmatpush1.bf16.msra.mxu0 %v893
    %918 = vmatprep.subr.bf16.mxu0 0
    %919 = vmatpush1.bf16.msra.mxu0 0
    %920 = vmatprep.subr.bf16.mxu0 0
    %921 = vmatpush1.bf16.msra.mxu0 0
    %922 = vmatprep.subr.bf16.mxu0 0
    %923 = vmatpush1.bf16.msra.mxu0 0
    %924 = vmatprep.subr.bf16.mxu0 0
    %925 = vmatpush1.bf16.msra.mxu0 0
    %926 = vmatprep.subr.bf16.mxu0 0
    %927 = vmatpush1.bf16.msra.mxu0 0
    %928 = vmatprep.subr.bf16.mxu0 0
    %929 = vmatpush1.bf16.msra.mxu0 0
    %930 = vmatprep.subr.bf16.mxu0 0
    %931 = vmatpush1.bf16.msra.mxu0 0
    %932 = vmatprep.subr.bf16.mxu0 0
    %933 = vmatpush1.bf16.msra.mxu0 0
    %934 = vmatprep.mubr.bf16.mxu0 0
    %935 = vmatmul.mubr.bf16.gmra.mrb[0].mxu0 %v827
    %v936 = vpop.f32.mrb[0].mxu0
    %v937 = vadd.f32 %v852, %v936
    %v938 = vpop.f32.mrb[0].mxu0
    %v939 = vpop.f32.mrb[0].mxu0
    %v940 = vadd.f32 %v852, %v939
    %v941 = vpop.f32.mrb[0].mxu0
    %942 = vmatprep.mubr.bf16.mxu0 0
    %943 = vmatmul.mubr.bf16.gmra.mrb[0].mxu0 %v828
    %v944 = vpop.f32.mrb[0].mxu0
    %v945 = vadd.f32 %v852, %v944
    %v946 = vpop.f32.mrb[0].mxu0
    %v947 = vpop.f32.mrb[0].mxu0
    %v948 = vadd.f32 %v852, %v947
    %v949 = vpop.f32.mrb[0].mxu0
    %950 = vmatprep.mubr.bf16.mxu0 0
    %951 = vmatmul.mubr.bf16.gmra.mrb[0].mxu0 %v829
    %v952 = vpop.f32.mrb[0].mxu0
    %v953 = vadd.f32 %v852, %v952
    %v954 = vpop.f32.mrb[0].mxu0
    %v955 = vpop.f32.mrb[0].mxu0
    %v956 = vadd.f32 %v852, %v955
    %v957 = vpop.f32.mrb[0].mxu0
    %958 = vmatprep.mubr.bf16.mxu0 0
    %959 = vmatmul.mubr.bf16.gmra.mrb[0].mxu0 %v830
    %v960 = vpop.f32.mrb[0].mxu0
    %v961 = vadd.f32 %v852, %v960
    %v962 = vpop.f32.mrb[0].mxu0
    %v963 = vpop.f32.mrb[0].mxu0
    %v964 = vadd.f32 %v852, %v963
    %v965 = vpop.f32.mrb[0].mxu0
    %966 = vdwg.mxu0
    %v967 = vpack.c.bf16 %v940, %v937
    %v968 = vpack.c.bf16 %v948, %v945
    %v969 = vpack.c.bf16 %v956, %v953
    %v970 = vpack.c.bf16 %v964, %v961
    %v975 = vunpack.c.l.b16 %v967
    %v976 = vunpack.c.h.b16 %v967
    %v977 = vunpack.c.l.b16 %v968
    %v978 = vunpack.c.h.b16 %v968
    %v979 = vunpack.c.l.b16 %v969
    %v980 = vunpack.c.h.b16 %v969
    %v981 = vunpack.c.l.b16 %v970
    %v982 = vunpack.c.h.b16 %v970
    %v983 = vpack.c.b16 %v975, %v975
    %v984 = vpack.c.b16 %v976, %v976
    %v985 = vpack.c.b16 %v977, %v977
    %v986 = vpack.c.b16 %v978, %v978
    %v987 = vpack.c.b16 %v979, %v979
    %v988 = vpack.c.b16 %v980, %v980
    %v989 = vpack.c.b16 %v981, %v981
    %v990 = vpack.c.b16 %v982, %v982
    %999 = vst [vmem:[#allocation8] sm:$0xf] %v983
    %1000 = vst [vmem:[#allocation8 + $0x4] sm:$0xf] %v984
    %1001 = vst [vmem:[#allocation8 + $0x8] sm:$0xf] %v985
    %1002 = vst [vmem:[#allocation8 + $0xc] sm:$0xf] %v986
    %1003 = vst [vmem:[#allocation8 + $0x10] sm:$0xf] %v987
    %1004 = vst [vmem:[#allocation8 + $0x14] sm:$0xf] %v988
    %1005 = vst [vmem:[#allocation8 + $0x18] sm:$0xf] %v989
    %1006 = vst [vmem:[#allocation8 + $0x1c] sm:$0xf] %v990
    // Predicated region
    $region34: #{tpu_custom_call.1} parent=1 // pred_check
      _
    $region35: #{tpu_custom_call.1} parent=1 // pred_check_branch
      %1008 = sbr.rel (0) target = $region37
    $region36: #{tpu_custom_call.1} parent=1 // pred_region
      %s1010 = ssub.s32 512, 512
      %1011 = vsyncadd [#allocation4], %s1010
      %s1012 = sshll.u32 [#allocation8], 4
      %s1013 = int_to_ptr.vmem [resolvable:$true] %s1012
      %1018 = dma.vmem_to_hbm [thread:$0]  %s1013, 512, %s5, [#allocation4], 64, 64, 4
    $region37: #{tpu_custom_call.1} parent=1 // pred_fallthru
      _
    // Predicated region
    $region38: #{tpu_custom_call.1} parent=1 // pred_check
      _
    $region39: #{tpu_custom_call.1} parent=1 // pred_check_branch
      %1020 = sbr.rel (0) target = $region41
    $region40: #{tpu_custom_call.1} parent=1 // pred_region
      %1021 = dma.done [#allocation4], 512
    $region41: #{tpu_custom_call.1} parent=1 // pred_fallthru
      _
    %1022 = vsyncpa [#allocation3], 1
    %1023 = vsyncpa [#allocation6], 1
    %1024 = vsyncpa [#allocation4], 1

</llo_original>
